<compile_context>
chip_gen: v6e
topology: v6e:2x2x1
jax: 0.10.0
libtpu: 0.0.40
codegen_flags: <defaults>
</compile_context>

<pallas_src>
import functools

import jax
import jax.numpy as jnp
from jax import lax
from jax.experimental import pallas as pl
from jax.experimental.pallas import tpu as pltpu


def _fused_vqvae_kernel(x_ref, ew1_ref, eb1_ref, ew2_ref, eb2_ref,
                        emb_ref, embt_ref, esq_ref,
                        dw1_ref, db1_ref, dw2_ref, db2_ref,
                        y_ref, sse_ref, *, m_total, tm):
    """One token tile: encoder -> VQ (+ partial SSE) -> relu -> decoder."""
    i = pl.program_id(0)
    x = x_ref[...]                                                  # (C, TM) f32

    # ---------------- encoder (bf16 MXU inputs, f32 accumulate) ----------------
    h = jnp.dot(ew1_ref[...].astype(jnp.bfloat16), x.astype(jnp.bfloat16),
                preferred_element_type=jnp.float32) + eb1_ref[...]
    h = jnp.maximum(h, 0.0)
    z = jnp.dot(ew2_ref[...].astype(jnp.bfloat16), h.astype(jnp.bfloat16),
                preferred_element_type=jnp.float32) + eb2_ref[...]  # (D, TM)

    # ------------- vector quantization (f32 for exact tie-breaks) --------------
    e = emb_ref[...]                                                # (K, D)
    k = e.shape[0]
    z_sq = jnp.sum(z * z, axis=0, keepdims=True)                    # (1, TM)
    cross = jnp.dot(e, z, preferred_element_type=jnp.float32)       # (K, TM)
    dist = z_sq + esq_ref[...] - 2.0 * cross                        # (K, TM)

    iota_k = lax.broadcasted_iota(jnp.int32, dist.shape, 0)
    min_val = jnp.min(dist, axis=0, keepdims=True)
    idx = jnp.min(jnp.where(dist == min_val, iota_k, k),
                  axis=0, keepdims=True)                            # (1, TM) first-occurrence argmin
    onehot = (iota_k == idx).astype(jnp.float32)                    # (K, TM)
    # q[:, m] = embedding[idx[m]]  (scatter_ + matmul in the PyTorch code).
    # TODO(synk): for large codebooks (K >= 512) switch to a gather-based lookup.
    q = jnp.dot(embt_ref[...], onehot,
                preferred_element_type=jnp.float32)                 # (D, TM)

    # ------- per-tile SSE partial (padding columns masked; f32 exact) ----------
    col = lax.broadcasted_iota(jnp.int32, (1, tm), 1) + i * tm
    valid = (col < m_total).astype(jnp.float32)                     # (1, TM)
    diff = (q - z) * valid
    sse_ref[...] = jnp.zeros(sse_ref.shape, jnp.float32) + jnp.sum(diff * diff)

    # straight-through forward value == q; VQVAE.forward applies F.relu after it.
    q = jnp.maximum(q, 0.0)

    # --------------------------------- decoder ---------------------------------
    hd = jnp.dot(dw1_ref[...].astype(jnp.bfloat16), q.astype(jnp.bfloat16),
                 preferred_element_type=jnp.float32) + db1_ref[...]
    hd = jnp.maximum(hd, 0.0)
    y_ref[...] = jnp.dot(dw2_ref[...].astype(jnp.bfloat16), hd.astype(jnp.bfloat16),
                         preferred_element_type=jnp.float32) + db2_ref[...]


def vqvae_forward(x_nchw, params, beta, tm=512):
    assert tm % 128 == 0, "token tile must be a multiple of 128 lanes"
    B, C, H, W = x_nchw.shape
    M = B * H * W
    nd = params["enc_w1"].shape[0]
    D = params["enc_w2"].shape[0]
    K = params["embedding"].shape[0]

    num_tiles = pl.cdiv(M, tm)
    m_pad = num_tiles * tm

    # Feature-major, lane-dense layout: (C, B*H*W); pad token axis to tile size.
    xT = jnp.transpose(x_nchw, (1, 0, 2, 3)).reshape(C, M).astype(jnp.float32)
    if m_pad != M:
        xT = jnp.pad(xT, ((0, 0), (0, m_pad - M)))

    emb = params["embedding"]
    emb_t = emb.T                                                   # (D, K)
    e_sq = jnp.sum(emb * emb, axis=1, keepdims=True)                # (K, 1) hoisted

    kernel = functools.partial(_fused_vqvae_kernel, m_total=M, tm=tm)

    flops = 2 * m_pad * (C * nd + nd * D + 2 * D * K + D * nd + nd * C)
    weight_bytes = 4 * (nd * C + nd + D * nd + D + 2 * K * D + K
                        + nd * D + nd + C * nd + C)
    bytes_accessed = 4 * (2 * C * m_pad + num_tiles * 8 * 128) + weight_bytes

    yT, sse_partials = pl.pallas_call(
        kernel,
        out_shape=(
            jax.ShapeDtypeStruct((C, m_pad), jnp.float32),
            jax.ShapeDtypeStruct((num_tiles * 8, 128), jnp.float32),
        ),
        grid_spec=pltpu.PrefetchScalarGridSpec(
            num_scalar_prefetch=0,
            grid=(num_tiles,),
            in_specs=[
                pl.BlockSpec((C, tm), lambda i: (0, i)),    # x tile (lane-dense)
                pl.BlockSpec((nd, C), lambda i: (0, 0)),    # enc_w1
                pl.BlockSpec((nd, 1), lambda i: (0, 0)),    # enc_b1
                pl.BlockSpec((D, nd), lambda i: (0, 0)),    # enc_w2
                pl.BlockSpec((D, 1), lambda i: (0, 0)),     # enc_b2
                pl.BlockSpec((K, D), lambda i: (0, 0)),     # embedding
                pl.BlockSpec((D, K), lambda i: (0, 0)),     # embedding^T
                pl.BlockSpec((K, 1), lambda i: (0, 0)),     # ||e||^2 (hoisted)
                pl.BlockSpec((nd, D), lambda i: (0, 0)),    # dec_w1
                pl.BlockSpec((nd, 1), lambda i: (0, 0)),    # dec_b1
                pl.BlockSpec((C, nd), lambda i: (0, 0)),    # dec_w2
                pl.BlockSpec((C, 1), lambda i: (0, 0)),     # dec_b2
            ],
            out_specs=(
                pl.BlockSpec((C, tm), lambda i: (0, i)),    # reconstruction tile
                pl.BlockSpec((8, 128), lambda i: (i, 0)),   # per-tile SSE partial
            ),
        ),
        compiler_params=pltpu.CompilerParams(
            dimension_semantics=("parallel",)),
        cost_estimate=pl.CostEstimate(
            flops=flops, transcendentals=0, bytes_accessed=bytes_accessed),
    )(xT, params["enc_w1"], params["enc_b1"], params["enc_w2"], params["enc_b2"],
      emb, emb_t, e_sq,
      params["dec_w1"], params["dec_b1"], params["dec_w2"], params["dec_b2"])

    # Reduce per-tile partial SSEs (one value per tile, written to slot [0, 0]).
    sse_total = jnp.sum(sse_partials.reshape(num_tiles, 8 * 128)[:, 0])
    mse = sse_total / (M * D)
    loss = (1.0 + beta) * mse    # ze_loss + beta * e_loss; both equal mse in forward

    y = yT[:, :M]
    x_rec = jnp.transpose(y.reshape(C, B, H, W), (1, 0, 2, 3))      # back to NCHW
    return x_rec, loss


def init_params(key, in_ch, nd, embed_dim, n_embeddings):
    ks = jax.random.split(key, 5)
    scale = 0.1
    return {
        # feature-major (out, in) weights == PyTorch conv/linear weight layout
        "enc_w1": scale * jax.random.normal(ks[0], (nd, in_ch), jnp.float32),
        "enc_b1": jnp.zeros((nd, 1), jnp.float32),
        "enc_w2": scale * jax.random.normal(ks[1], (embed_dim, nd), jnp.float32),
        "enc_b2": jnp.zeros((embed_dim, 1), jnp.float32),
        "dec_w1": scale * jax.random.normal(ks[2], (nd, embed_dim), jnp.float32),
        "dec_b1": jnp.zeros((nd, 1), jnp.float32),
        "dec_w2": scale * jax.random.normal(ks[3], (in_ch, nd), jnp.float32),
        "dec_b2": jnp.zeros((in_ch, 1), jnp.float32),
        # nn.Embedding weight, uniform(-1/num_embed, 1/num_embed)
        "embedding": jax.random.uniform(
            ks[4], (n_embeddings, embed_dim), jnp.float32,
            minval=-1.0 / n_embeddings, maxval=1.0 / n_embeddings),
    }


if __name__ == "__main__":
    B, C, H, W = 2, 4, 16, 16
    nd, embed_dim, n_embeddings, beta = 32, 16, 8, 0.25

    key = jax.random.PRNGKey(0)
    k_params, k_x = jax.random.split(key)
    params = init_params(k_params, C, nd, embed_dim, n_embeddings)
    x = jax.random.normal(k_x, (B, C, H, W), dtype=jnp.float32)

    fwd = jax.jit(lambda xx: vqvae_forward(xx, params, beta))
    x_rec, loss = fwd(x)
    jax.block_until_ready((x_rec, loss))

    assert x_rec.shape == (B, C, H, W)
    assert x_rec.dtype == jnp.float32
    assert loss.shape == ()
    assert bool(jnp.isfinite(loss))
    print("KERNEL_OK")
</pallas_src>

<mosaic_0001>
module attributes {stable_mosaic.version = 11 : i64} {
  func.func @_fused_vqvae_kernel(%arg0: i32, %arg1: memref<4x512xf32, #tpu.memory_space<vmem>>, %arg2: memref<32x4xf32, #tpu.memory_space<vmem>>, %arg3: memref<32x1xf32, #tpu.memory_space<vmem>>, %arg4: memref<16x32xf32, #tpu.memory_space<vmem>>, %arg5: memref<16x1xf32, #tpu.memory_space<vmem>>, %arg6: memref<8x16xf32, #tpu.memory_space<vmem>>, %arg7: memref<16x8xf32, #tpu.memory_space<vmem>>, %arg8: memref<8x1xf32, #tpu.memory_space<vmem>>, %arg9: memref<32x16xf32, #tpu.memory_space<vmem>>, %arg10: memref<32x1xf32, #tpu.memory_space<vmem>>, %arg11: memref<4x32xf32, #tpu.memory_space<vmem>>, %arg12: memref<4x1xf32, #tpu.memory_space<vmem>>, %arg13: memref<4x512xf32, #tpu.memory_space<vmem>>, %arg14: memref<8x128xf32, #tpu.memory_space<vmem>>) attributes {dimension_semantics = [#tpu.dimension_semantics<parallel>], iteration_bounds = array<i64: 1>, scalar_prefetch = 0 : i64, scratch_operands = 0 : i64, tpu.core_type = #tpu.core_type<tc>, window_params = [{transform_indices = @transform_0, window_bounds = array<i64: 4, 512>}, {pipeline_mode = #tpu.pipeline_mode<synchronous>, transform_indices = @transform_1, window_bounds = array<i64: 32, 4>}, {pipeline_mode = #tpu.pipeline_mode<synchronous>, transform_indices = @transform_2, window_bounds = array<i64: 32, 1>}, {pipeline_mode = #tpu.pipeline_mode<synchronous>, transform_indices = @transform_3, window_bounds = array<i64: 16, 32>}, {pipeline_mode = #tpu.pipeline_mode<synchronous>, transform_indices = @transform_4, window_bounds = array<i64: 16, 1>}, {pipeline_mode = #tpu.pipeline_mode<synchronous>, transform_indices = @transform_5, window_bounds = array<i64: 8, 16>}, {pipeline_mode = #tpu.pipeline_mode<synchronous>, transform_indices = @transform_6, window_bounds = array<i64: 16, 8>}, {pipeline_mode = #tpu.pipeline_mode<synchronous>, transform_indices = @transform_7, window_bounds = array<i64: 8, 1>}, {pipeline_mode = #tpu.pipeline_mode<synchronous>, transform_indices = @transform_8, window_bounds = array<i64: 32, 16>}, {pipeline_mode = #tpu.pipeline_mode<synchronous>, transform_indices = @transform_9, window_bounds = array<i64: 32, 1>}, {pipeline_mode = #tpu.pipeline_mode<synchronous>, transform_indices = @transform_10, window_bounds = array<i64: 4, 32>}, {pipeline_mode = #tpu.pipeline_mode<synchronous>, transform_indices = @transform_11, window_bounds = array<i64: 4, 1>}, {transform_indices = @transform_12, window_bounds = array<i64: 4, 512>}, {transform_indices = @transform_13, window_bounds = array<i64: 8, 128>}]} {
    %c0 = arith.constant 0 : index
    %c0_0 = arith.constant 0 : index
    %0 = vector.load %arg1[%c0, %c0_0] : memref<4x512xf32, #tpu.memory_space<vmem>>, vector<4x512xf32>
    %c0_1 = arith.constant 0 : index
    %c0_2 = arith.constant 0 : index
    %1 = vector.load %arg2[%c0_1, %c0_2] : memref<32x4xf32, #tpu.memory_space<vmem>>, vector<32x4xf32>
    %2 = arith.truncf %1 : vector<32x4xf32> to vector<32x4xbf16>
    %3 = arith.truncf %0 : vector<4x512xf32> to vector<4x512xbf16>
    %cst = arith.constant dense<0.000000e+00> : vector<32x512xf32>
    %4 = tpu.matmul %2, %3, %cst {dimension_numbers = #tpu.dot_dimension_numbers<[1], [0], [0], [1], [0, 0, 1, 1], [], []>} : vector<32x4xbf16>, vector<4x512xbf16>, vector<32x512xf32> -> vector<32x512xf32>
    %c0_3 = arith.constant 0 : index
    %c0_4 = arith.constant 0 : index
    %5 = vector.load %arg3[%c0_3, %c0_4] : memref<32x1xf32, #tpu.memory_space<vmem>>, vector<32x1xf32>
    %6 = vector.broadcast %5 : vector<32x1xf32> to vector<32x512xf32>
    %7 = arith.addf %4, %6 : vector<32x512xf32>
    %cst_5 = arith.constant 0.000000e+00 : f32
    %8 = vector.broadcast %cst_5 : f32 to vector<32x512xf32>
    %9 = arith.maximumf %7, %8 : vector<32x512xf32>
    %c0_6 = arith.constant 0 : index
    %c0_7 = arith.constant 0 : index
    %10 = vector.load %arg4[%c0_6, %c0_7] : memref<16x32xf32, #tpu.memory_space<vmem>>, vector<16x32xf32>
    %11 = arith.truncf %10 : vector<16x32xf32> to vector<16x32xbf16>
    %12 = arith.truncf %9 : vector<32x512xf32> to vector<32x512xbf16>
    %cst_8 = arith.constant dense<0.000000e+00> : vector<16x512xf32>
    %13 = tpu.matmul %11, %12, %cst_8 {dimension_numbers = #tpu.dot_dimension_numbers<[1], [0], [0], [1], [0, 0, 1, 1], [], []>} : vector<16x32xbf16>, vector<32x512xbf16>, vector<16x512xf32> -> vector<16x512xf32>
    %c0_9 = arith.constant 0 : index
    %c0_10 = arith.constant 0 : index
    %14 = vector.load %arg5[%c0_9, %c0_10] : memref<16x1xf32, #tpu.memory_space<vmem>>, vector<16x1xf32>
    %15 = vector.broadcast %14 : vector<16x1xf32> to vector<16x512xf32>
    %16 = arith.addf %13, %15 : vector<16x512xf32>
    %c0_11 = arith.constant 0 : index
    %c0_12 = arith.constant 0 : index
    %17 = vector.load %arg6[%c0_11, %c0_12] : memref<8x16xf32, #tpu.memory_space<vmem>>, vector<8x16xf32>
    %18 = arith.mulf %16, %16 : vector<16x512xf32>
    %cst_13 = arith.constant dense<0.000000e+00> : vector<512xf32>
    %19 = vector.multi_reduction <add>, %18, %cst_13 [0] : vector<16x512xf32> to vector<512xf32>
    %20 = vector.shape_cast %19 : vector<512xf32> to vector<1x512xf32>
    %cst_14 = arith.constant dense<0.000000e+00> : vector<8x512xf32>
    %21 = tpu.matmul %17, %16, %cst_14 {dimension_numbers = #tpu.dot_dimension_numbers<[1], [0], [0], [1], [0, 0, 1, 1], [], []>} : vector<8x16xf32>, vector<16x512xf32>, vector<8x512xf32> -> vector<8x512xf32>
    %c0_15 = arith.constant 0 : index
    %c0_16 = arith.constant 0 : index
    %22 = vector.load %arg8[%c0_15, %c0_16] : memref<8x1xf32, #tpu.memory_space<vmem>>, vector<8x1xf32>
    %23 = vector.broadcast %20 : vector<1x512xf32> to vector<8x512xf32>
    %24 = vector.broadcast %22 : vector<8x1xf32> to vector<8x512xf32>
    %25 = arith.addf %23, %24 : vector<8x512xf32>
    %cst_17 = arith.constant 2.000000e+00 : f32
    %26 = vector.broadcast %cst_17 : f32 to vector<8x512xf32>
    %27 = arith.mulf %26, %21 : vector<8x512xf32>
    %28 = arith.subf %25, %27 : vector<8x512xf32>
    %29 = tpu.iota {dimensions = array<i32: 0>} : vector<8x512xi32>
    %cst_18 = arith.constant dense<0x7F800000> : vector<512xf32>
    %30 = vector.multi_reduction <minimumf>, %28, %cst_18 [0] : vector<8x512xf32> to vector<512xf32>
    %31 = vector.shape_cast %30 : vector<512xf32> to vector<1x512xf32>
    %32 = vector.broadcast %31 : vector<1x512xf32> to vector<8x512xf32>
    %33 = arith.cmpf oeq, %28, %32 : vector<8x512xf32>
    %c8_i32 = arith.constant 8 : i32
    %34 = vector.broadcast %c8_i32 : i32 to vector<8x512xi32>
    %35 = arith.select %33, %29, %34 : vector<8x512xi1>, vector<8x512xi32>
    %cst_19 = arith.constant dense<2147483647> : vector<512xi32>
    %36 = vector.multi_reduction <minsi>, %35, %cst_19 [0] : vector<8x512xi32> to vector<512xi32>
    %37 = vector.shape_cast %36 : vector<512xi32> to vector<1x512xi32>
    %38 = vector.broadcast %37 : vector<1x512xi32> to vector<8x512xi32>
    %39 = arith.cmpi eq, %29, %38 : vector<8x512xi32>
    %40 = arith.extui %39 : vector<8x512xi1> to vector<8x512xi32>
    %41 = arith.sitofp %40 : vector<8x512xi32> to vector<8x512xf32>
    %c0_20 = arith.constant 0 : index
    %c0_21 = arith.constant 0 : index
    %42 = vector.load %arg7[%c0_20, %c0_21] : memref<16x8xf32, #tpu.memory_space<vmem>>, vector<16x8xf32>
    %cst_22 = arith.constant dense<0.000000e+00> : vector<16x512xf32>
    %43 = tpu.matmul %42, %41, %cst_22 {dimension_numbers = #tpu.dot_dimension_numbers<[1], [0], [0], [1], [0, 0, 1, 1], [], []>} : vector<16x8xf32>, vector<8x512xf32>, vector<16x512xf32> -> vector<16x512xf32>
    %44 = tpu.iota {dimensions = array<i32: 1>} : vector<1x512xi32>
    %c512_i32 = arith.constant 512 : i32
    %45 = arith.muli %arg0, %c512_i32 : i32
    %46 = vector.broadcast %45 : i32 to vector<1x512xi32>
    %47 = arith.addi %44, %46 : vector<1x512xi32>
    %c512_i32_23 = arith.constant 512 : i32
    %48 = vector.broadcast %c512_i32_23 : i32 to vector<1x512xi32>
    %49 = arith.cmpi slt, %47, %48 : vector<1x512xi32>
    %50 = arith.extui %49 : vector<1x512xi1> to vector<1x512xi32>
    %51 = arith.sitofp %50 : vector<1x512xi32> to vector<1x512xf32>
    %52 = arith.subf %43, %16 : vector<16x512xf32>
    %53 = vector.broadcast %51 : vector<1x512xf32> to vector<16x512xf32>
    %54 = arith.mulf %52, %53 : vector<16x512xf32>
    %cst_24 = arith.constant 0.000000e+00 : f32
    %55 = vector.broadcast %cst_24 : f32 to vector<8x128xf32>
    %56 = arith.mulf %54, %54 : vector<16x512xf32>
    %57 = vector.shape_cast %56 : vector<16x512xf32> to vector<1x16x512xf32>
    %cst_25 = arith.constant dense<0.000000e+00> : vector<1xf32>
    %58 = vector.multi_reduction <add>, %57, %cst_25 [1, 2] : vector<1x16x512xf32> to vector<1xf32>
    %59 = vector.shape_cast %58 : vector<1xf32> to vector<1x1x1xf32>
    %60 = vector.extract %59[0, 0, 0] : f32 from vector<1x1x1xf32>
    %61 = vector.broadcast %60 : f32 to vector<8x128xf32>
    %62 = arith.addf %55, %61 : vector<8x128xf32>
    %c0_26 = arith.constant 0 : index
    %c0_27 = arith.constant 0 : index
    %63 = vector.load %arg14[%c0_26, %c0_27] : memref<8x128xf32, #tpu.memory_space<vmem>>, vector<8x128xf32>
    tpu.vector_store %arg14[%c0_26, %c0_27], %62 {strides = array<i32>} : memref<8x128xf32, #tpu.memory_space<vmem>>, vector<8x128xf32>,
    %cst_28 = arith.constant 0.000000e+00 : f32
    %64 = vector.broadcast %cst_28 : f32 to vector<16x512xf32>
    %65 = arith.maximumf %43, %64 : vector<16x512xf32>
    %c0_29 = arith.constant 0 : index
    %c0_30 = arith.constant 0 : index
    %66 = vector.load %arg9[%c0_29, %c0_30] : memref<32x16xf32, #tpu.memory_space<vmem>>, vector<32x16xf32>
    %67 = arith.truncf %66 : vector<32x16xf32> to vector<32x16xbf16>
    %68 = arith.truncf %65 : vector<16x512xf32> to vector<16x512xbf16>
    %cst_31 = arith.constant dense<0.000000e+00> : vector<32x512xf32>
    %69 = tpu.matmul %67, %68, %cst_31 {dimension_numbers = #tpu.dot_dimension_numbers<[1], [0], [0], [1], [0, 0, 1, 1], [], []>} : vector<32x16xbf16>, vector<16x512xbf16>, vector<32x512xf32> -> vector<32x512xf32>
    %c0_32 = arith.constant 0 : index
    %c0_33 = arith.constant 0 : index
    %70 = vector.load %arg10[%c0_32, %c0_33] : memref<32x1xf32, #tpu.memory_space<vmem>>, vector<32x1xf32>
    %71 = vector.broadcast %70 : vector<32x1xf32> to vector<32x512xf32>
    %72 = arith.addf %69, %71 : vector<32x512xf32>
    %cst_34 = arith.constant 0.000000e+00 : f32
    %73 = vector.broadcast %cst_34 : f32 to vector<32x512xf32>
    %74 = arith.maximumf %72, %73 : vector<32x512xf32>
    %c0_35 = arith.constant 0 : index
    %c0_36 = arith.constant 0 : index
    %75 = vector.load %arg11[%c0_35, %c0_36] : memref<4x32xf32, #tpu.memory_space<vmem>>, vector<4x32xf32>
    %76 = arith.truncf %75 : vector<4x32xf32> to vector<4x32xbf16>
    %77 = arith.truncf %74 : vector<32x512xf32> to vector<32x512xbf16>
    %cst_37 = arith.constant dense<0.000000e+00> : vector<4x512xf32>
    %78 = tpu.matmul %76, %77, %cst_37 {dimension_numbers = #tpu.dot_dimension_numbers<[1], [0], [0], [1], [0, 0, 1, 1], [], []>} : vector<4x32xbf16>, vector<32x512xbf16>, vector<4x512xf32> -> vector<4x512xf32>
    %c0_38 = arith.constant 0 : index
    %c0_39 = arith.constant 0 : index
    %79 = vector.load %arg12[%c0_38, %c0_39] : memref<4x1xf32, #tpu.memory_space<vmem>>, vector<4x1xf32>
    %80 = vector.broadcast %79 : vector<4x1xf32> to vector<4x512xf32>
    %81 = arith.addf %78, %80 : vector<4x512xf32>
    %c0_40 = arith.constant 0 : index
    %c0_41 = arith.constant 0 : index
    %82 = vector.load %arg13[%c0_40, %c0_41] : memref<4x512xf32, #tpu.memory_space<vmem>>, vector<4x512xf32>
    tpu.vector_store %arg13[%c0_40, %c0_41], %81 {strides = array<i32>} : memref<4x512xf32, #tpu.memory_space<vmem>>, vector<4x512xf32>,
    return
  }
  func.func @transform_0(%arg0: i32) -> (i32, i32) {
    %c0_i32 = arith.constant 0 : i32
    %c0_i32_0 = arith.constant 0 : i32
    return %c0_i32, %arg0 : i32, i32
  }
  func.func @transform_1(%arg0: i32) -> (i32, i32) {
    %c0_i32 = arith.constant 0 : i32
    %c0_i32_0 = arith.constant 0 : i32
    %c0_i32_1 = arith.constant 0 : i32
    return %c0_i32, %c0_i32_0 : i32, i32
  }
  func.func @transform_2(%arg0: i32) -> (i32, i32) {
    %c0_i32 = arith.constant 0 : i32
    %c0_i32_0 = arith.constant 0 : i32
    %c0_i32_1 = arith.constant 0 : i32
    return %c0_i32, %c0_i32_0 : i32, i32
  }
  func.func @transform_3(%arg0: i32) -> (i32, i32) {
    %c0_i32 = arith.constant 0 : i32
    %c0_i32_0 = arith.constant 0 : i32
    %c0_i32_1 = arith.constant 0 : i32
    return %c0_i32, %c0_i32_0 : i32, i32
  }
  func.func @transform_4(%arg0: i32) -> (i32, i32) {
    %c0_i32 = arith.constant 0 : i32
    %c0_i32_0 = arith.constant 0 : i32
    %c0_i32_1 = arith.constant 0 : i32
    return %c0_i32, %c0_i32_0 : i32, i32
  }
  func.func @transform_5(%arg0: i32) -> (i32, i32) {
    %c0_i32 = arith.constant 0 : i32
    %c0_i32_0 = arith.constant 0 : i32
    %c0_i32_1 = arith.constant 0 : i32
    return %c0_i32, %c0_i32_0 : i32, i32
  }
  func.func @transform_6(%arg0: i32) -> (i32, i32) {
    %c0_i32 = arith.constant 0 : i32
    %c0_i32_0 = arith.constant 0 : i32
    %c0_i32_1 = arith.constant 0 : i32
    return %c0_i32, %c0_i32_0 : i32, i32
  }
  func.func @transform_7(%arg0: i32) -> (i32, i32) {
    %c0_i32 = arith.constant 0 : i32
    %c0_i32_0 = arith.constant 0 : i32
    %c0_i32_1 = arith.constant 0 : i32
    return %c0_i32, %c0_i32_0 : i32, i32
  }
  func.func @transform_8(%arg0: i32) -> (i32, i32) {
    %c0_i32 = arith.constant 0 : i32
    %c0_i32_0 = arith.constant 0 : i32
    %c0_i32_1 = arith.constant 0 : i32
    return %c0_i32, %c0_i32_0 : i32, i32
  }
  func.func @transform_9(%arg0: i32) -> (i32, i32) {
    %c0_i32 = arith.constant 0 : i32
    %c0_i32_0 = arith.constant 0 : i32
    %c0_i32_1 = arith.constant 0 : i32
    return %c0_i32, %c0_i32_0 : i32, i32
  }
  func.func @transform_10(%arg0: i32) -> (i32, i32) {
    %c0_i32 = arith.constant 0 : i32
    %c0_i32_0 = arith.constant 0 : i32
    %c0_i32_1 = arith.constant 0 : i32
    return %c0_i32, %c0_i32_0 : i32, i32
  }
  func.func @transform_11(%arg0: i32) -> (i32, i32) {
    %c0_i32 = arith.constant 0 : i32
    %c0_i32_0 = arith.constant 0 : i32
    %c0_i32_1 = arith.constant 0 : i32
    return %c0_i32, %c0_i32_0 : i32, i32
  }
  func.func @transform_12(%arg0: i32) -> (i32, i32) {
    %c0_i32 = arith.constant 0 : i32
    %c0_i32_0 = arith.constant 0 : i32
    return %c0_i32, %arg0 : i32, i32
  }
  func.func @transform_13(%arg0: i32) -> (i32, i32) {
    %c0_i32 = arith.constant 0 : i32
    %c0_i32_0 = arith.constant 0 : i32
    return %arg0, %c0_i32 : i32, i32
  }
}

</mosaic_0001>

<llo_original>
// kernel: _lambda_.1
$region0: #{_lambda_.1}
  #allocation0 [shape = 'u32[]', space=smem, size = 0x4, offset = 0x4, fixed_abs, tag = 'smem constant byte address 0x4 - core index']
  #allocation1 [shape = 'u32[144,128]{1,0:T(1,128)}', space=vmem, size = 0x12000, scoped, tag = 'internal scratch']
  %s0 = inlined_call_operand.vmem [shape: f32[4,512], index: 0, kind: input, shape index: {}]
  %s1 = inlined_call_operand.vmem [shape: f32[32,4], index: 1, kind: input, shape index: {}]
  %s2 = inlined_call_operand.vmem [shape: f32[32,1], index: 2, kind: input, shape index: {}, may-alias: {2,9}]
  %s3 = inlined_call_operand.vmem [shape: f32[16,32], index: 3, kind: input, shape index: {}]
  %s4 = inlined_call_operand.vmem [shape: f32[16,1], index: 4, kind: input, shape index: {}]
  %s5 = inlined_call_operand.vmem [shape: f32[8,16], index: 5, kind: input, shape index: {}]
  %s6 = inlined_call_operand.vmem [shape: f32[16,8], index: 6, kind: input, shape index: {}]
  %s7 = inlined_call_operand.vmem [shape: f32[8,1], index: 7, kind: input, shape index: {}]
  %s8 = inlined_call_operand.vmem [shape: f32[32,16], index: 8, kind: input, shape index: {}]
  %s9 = inlined_call_operand.vmem [shape: f32[32,1], index: 9, kind: input, shape index: {}, may-alias: {2,9}]
  %s10 = inlined_call_operand.vmem [shape: f32[4,32], index: 10, kind: input, shape index: {}]
  %s11 = inlined_call_operand.vmem [shape: f32[4,1], index: 11, kind: input, shape index: {}]
  %s12 = inlined_call_operand.vmem [shape: f32[4,512], index: 12, kind: output, shape index: {0}]
  %s13 = inlined_call_operand.vmem [shape: f32[8,128], index: 13, kind: output, shape index: {1}]
  %14 = xla_tuple %s12, %s13
  %s15 = sld [smem:[#allocation0]]
  $region66: #{_lambda_.1} parent=0
    _
  %s17 = ssub.s32 1, %s15
  %s18 = scalar_select 0, %s17, %s15
  // Predicated region
  $region2: #{_lambda_.1} parent=0 // pred_check
    _
  $region3: #{_lambda_.1} parent=0 // pred_check_branch
    %20 = sbr.rel (0) target = $region5
  $region4: #{_lambda_.1} parent=0 // pred_region
    _
  $region5: #{_lambda_.1} parent=0 // pred_fallthru
    _
  // Predicated region
  $region6: #{_lambda_.1} parent=0 // pred_check
    _
  $region7: #{_lambda_.1} parent=0 // pred_check_branch
    %22 = sbr.rel (0) target = $region9
  $region8: #{_lambda_.1} parent=0 // pred_region
    _
  $region9: #{_lambda_.1} parent=0 // pred_fallthru
    _
  // Predicated region
  $region10: #{_lambda_.1} parent=0 // pred_check
    _
  $region11: #{_lambda_.1} parent=0 // pred_check_branch
    %24 = sbr.rel (0) target = $region13
  $region12: #{_lambda_.1} parent=0 // pred_region
    _
  $region13: #{_lambda_.1} parent=0 // pred_fallthru
    _
  // Predicated region
  $region14: #{_lambda_.1} parent=0 // pred_check
    _
  $region15: #{_lambda_.1} parent=0 // pred_check_branch
    %26 = sbr.rel (0) target = $region17
  $region16: #{_lambda_.1} parent=0 // pred_region
    _
  $region17: #{_lambda_.1} parent=0 // pred_fallthru
    _
  // Predicated region
  $region18: #{_lambda_.1} parent=0 // pred_check
    _
  $region19: #{_lambda_.1} parent=0 // pred_check_branch
    %28 = sbr.rel (0) target = $region21
  $region20: #{_lambda_.1} parent=0 // pred_region
    _
  $region21: #{_lambda_.1} parent=0 // pred_fallthru
    _
  // Predicated region
  $region22: #{_lambda_.1} parent=0 // pred_check
    _
  $region23: #{_lambda_.1} parent=0 // pred_check_branch
    %30 = sbr.rel (0) target = $region25
  $region24: #{_lambda_.1} parent=0 // pred_region
    _
  $region25: #{_lambda_.1} parent=0 // pred_fallthru
    _
  // Predicated region
  $region26: #{_lambda_.1} parent=0 // pred_check
    _
  $region27: #{_lambda_.1} parent=0 // pred_check_branch
    %32 = sbr.rel (0) target = $region29
  $region28: #{_lambda_.1} parent=0 // pred_region
    _
  $region29: #{_lambda_.1} parent=0 // pred_fallthru
    _
  // Predicated region
  $region30: #{_lambda_.1} parent=0 // pred_check
    _
  $region31: #{_lambda_.1} parent=0 // pred_check_branch
    %34 = sbr.rel (0) target = $region33
  $region32: #{_lambda_.1} parent=0 // pred_region
    _
  $region33: #{_lambda_.1} parent=0 // pred_fallthru
    _
  // Predicated region
  $region34: #{_lambda_.1} parent=0 // pred_check
    _
  $region35: #{_lambda_.1} parent=0 // pred_check_branch
    %36 = sbr.rel (0) target = $region37
  $region36: #{_lambda_.1} parent=0 // pred_region
    _
  $region37: #{_lambda_.1} parent=0 // pred_fallthru
    _
  // Predicated region
  $region38: #{_lambda_.1} parent=0 // pred_check
    _
  $region39: #{_lambda_.1} parent=0 // pred_check_branch
    %38 = sbr.rel (0) target = $region41
  $region40: #{_lambda_.1} parent=0 // pred_region
    _
  $region41: #{_lambda_.1} parent=0 // pred_fallthru
    _
  // Predicated region
  $region42: #{_lambda_.1} parent=0 // pred_check
    _
  $region43: #{_lambda_.1} parent=0 // pred_check_branch
    %40 = sbr.rel (0) target = $region45
  $region44: #{_lambda_.1} parent=0 // pred_region
    _
  $region45: #{_lambda_.1} parent=0 // pred_fallthru
    _
  // Predicated region
  $region46: #{_lambda_.1} parent=0 // pred_check
    _
  $region47: #{_lambda_.1} parent=0 // pred_check_branch
    %42 = sbr.rel (0) target = $region49
  $region48: #{_lambda_.1} parent=0 // pred_region
    _
  $region49: #{_lambda_.1} parent=0 // pred_fallthru
    _
  %v44 = vld [vmem:[%s0] sm:$0xff]
  %v45 = vld [vmem:[%s0 + $0x8] sm:$0xff]
  %v46 = vld [vmem:[%s1] sm:$0xff]
  %v47 = vld [vmem:[%s1 + $0x8] sm:$0xff]
  %v48 = vld [vmem:[%s1 + $0x10] sm:$0xff]
  %v49 = vld [vmem:[%s1 + $0x18] sm:$0xff]
  %v50 = vpack.c.bf16 %v47, %v46
  %v51 = vpack.c.bf16 %v49, %v48
  %v54 = vcombine.high %v44, %v44
  %v55 = vcombine.high %v45, %v45
  %v58 = vpack.c.bf16 %v44, %v44
  %v59 = vpack.c.bf16 %v54, %v54
  %v60 = vpack.c.bf16 %v45, %v45
  %v61 = vpack.c.bf16 %v55, %v55
  %v62 = vld [vmem:[%s2] sm:$0xff]
  %v63 = vld [vmem:[%s2 + $0x8] sm:$0xff]
  %v64 = vld [vmem:[%s2 + $0x10] sm:$0xff]
  %v65 = vld [vmem:[%s2 + $0x18] sm:$0xff]
  %67 = vset.pattern.permute.xlu0 0
  %68 = vperm.xlu0 %67, %v62
  %v69 = vpop.permute.xlu0 %68
  %72 = vset.pattern.permute.xlu0 0
  %73 = vperm.xlu0 %72, %v63
  %v74 = vpop.permute.xlu0 %73
  %77 = vset.pattern.permute.xlu0 0
  %78 = vperm.xlu0 %77, %v64
  %v79 = vpop.permute.xlu0 %78
  %82 = vset.pattern.permute.xlu0 0
  %83 = vperm.xlu0 %82, %v65
  %v84 = vpop.permute.xlu0 %83
  %vm86 = vcmask 31744
  %v88 = vsel %vm86, %v50, 0
  %v91 = vsel %vm86, %v51, 0
  %vm93 = vcmask 1041408
  %v95 = vsel %vm93, %v58, 0
  %v98 = vsel %vm93, %v59, 0
  %v101 = vsel %vm93, %v60, 0
  %v104 = vsel %vm93, %v61, 0
  %106 = vmatprep.subr.bf16.mxu0 0
  %107 = vmatpush1.bf16.msra.mxu0 0
  %108 = vmatprep.subr.bf16.mxu0 0
  %109 = vmatpush1.bf16.msra.mxu0 0
  %110 = vmatprep.subr.bf16.mxu0 0
  %111 = vmatpush1.bf16.msra.mxu0 0
  %112 = vmatprep.subr.bf16.mxu0 0
  %113 = vmatpush1.bf16.msra.mxu0 0
  %114 = vmatprep.subr.bf16.mxu0 0
  %115 = vmatpush1.bf16.msra.mxu0 0
  %116 = vmatprep.subr.bf16.mxu0 0
  %117 = vmatpush1.bf16.msra.mxu0 0
  %118 = vmatprep.subr.bf16.mxu0 0
  %119 = vmatpush1.bf16.msra.mxu0 0
  %120 = vmatprep.subr.bf16.mxu0 %v98
  %121 = vmatpush1.bf16.msra.mxu0 %v95
  %122 = vmatprep.subr.bf16.mxu0 0
  %123 = vmatpush2.bf16.msra.mxu0 0
  %124 = vmatprep.subr.bf16.mxu0 0
  %125 = vmatpush2.bf16.msra.mxu0 0
  %126 = vmatprep.subr.bf16.mxu0 0
  %127 = vmatpush2.bf16.msra.mxu0 0
  %128 = vmatprep.subr.bf16.mxu0 0
  %129 = vmatpush2.bf16.msra.mxu0 0
  %130 = vmatprep.subr.bf16.mxu0 0
  %131 = vmatpush2.bf16.msra.mxu0 0
  %132 = vmatprep.subr.bf16.mxu0 0
  %133 = vmatpush2.bf16.msra.mxu0 0
  %134 = vmatprep.subr.bf16.mxu0 0
  %135 = vmatpush2.bf16.msra.mxu0 0
  %136 = vmatprep.subr.bf16.mxu0 0
  %137 = vmatpush2.bf16.msra.mxu0 0
  %138 = vmatprep.mubr.bf16.mxu0 0
  %139 = vmatmul.mubr.bf16.gmra.mxu0 %v88
  %v140 = vpop.f32.mrf.mxu0
  %v141 = vadd.f32 %v69, %v140
  %v142 = vpop.f32.mrf.mxu0
  %v143 = vadd.f32 %v69, %v142
  %v144 = vpop.f32.mrf.mxu0
  %v145 = vadd.f32 %v74, %v144
  %v146 = vpop.f32.mrf.mxu0
  %v147 = vadd.f32 %v74, %v146
  %148 = vmatprep.mubr.bf16.mxu0 0
  %149 = vmatmul.mubr.bf16.gmra.mxu0 %v91
  %v150 = vpop.f32.mrf.mxu0
  %v151 = vadd.f32 %v79, %v150
  %v152 = vpop.f32.mrf.mxu0
  %v153 = vadd.f32 %v79, %v152
  %v154 = vpop.f32.mrf.mxu0
  %v155 = vadd.f32 %v84, %v154
  %v156 = vpop.f32.mrf.mxu0
  %v157 = vadd.f32 %v84, %v156
  %158 = vdwg.mxu0
  %159 = vmatprep.subr.bf16.mxu0 0
  %160 = vmatpush1.bf16.msra.mxu0 0
  %161 = vmatprep.subr.bf16.mxu0 0
  %162 = vmatpush1.bf16.msra.mxu0 0
  %163 = vmatprep.subr.bf16.mxu0 0
  %164 = vmatpush1.bf16.msra.mxu0 0
  %165 = vmatprep.subr.bf16.mxu0 0
  %166 = vmatpush1.bf16.msra.mxu0 0
  %167 = vmatprep.subr.bf16.mxu0 0
  %168 = vmatpush1.bf16.msra.mxu0 0
  %169 = vmatprep.subr.bf16.mxu0 0
  %170 = vmatpush1.bf16.msra.mxu0 0
  %171 = vmatprep.subr.bf16.mxu0 0
  %172 = vmatpush1.bf16.msra.mxu0 0
  %173 = vmatprep.subr.bf16.mxu0 %v104
  %174 = vmatpush1.bf16.msra.mxu0 %v101
  %175 = vmatprep.subr.bf16.mxu0 0
  %176 = vmatpush2.bf16.msra.mxu0 0
  %177 = vmatprep.subr.bf16.mxu0 0
  %178 = vmatpush2.bf16.msra.mxu0 0
  %179 = vmatprep.subr.bf16.mxu0 0
  %180 = vmatpush2.bf16.msra.mxu0 0
  %181 = vmatprep.subr.bf16.mxu0 0
  %182 = vmatpush2.bf16.msra.mxu0 0
  %183 = vmatprep.subr.bf16.mxu0 0
  %184 = vmatpush2.bf16.msra.mxu0 0
  %185 = vmatprep.subr.bf16.mxu0 0
  %186 = vmatpush2.bf16.msra.mxu0 0
  %187 = vmatprep.subr.bf16.mxu0 0
  %188 = vmatpush2.bf16.msra.mxu0 0
  %189 = vmatprep.subr.bf16.mxu0 0
  %190 = vmatpush2.bf16.msra.mxu0 0
  %191 = vmatprep.mubr.bf16.mxu0 0
  %192 = vmatmul.mubr.bf16.gmra.mxu0 %v88
  %v193 = vpop.f32.mrf.mxu0
  %v194 = vadd.f32 %v69, %v193
  %v195 = vpop.f32.mrf.mxu0
  %v196 = vadd.f32 %v69, %v195
  %v197 = vpop.f32.mrf.mxu0
  %v198 = vadd.f32 %v74, %v197
  %v199 = vpop.f32.mrf.mxu0
  %v200 = vadd.f32 %v74, %v199
  %201 = vmatprep.mubr.bf16.mxu0 0
  %202 = vmatmul.mubr.bf16.gmra.mxu0 %v91
  %v203 = vpop.f32.mrf.mxu0
  %v204 = vadd.f32 %v79, %v203
  %v205 = vpop.f32.mrf.mxu0
  %v206 = vadd.f32 %v79, %v205
  %v207 = vpop.f32.mrf.mxu0
  %v208 = vadd.f32 %v84, %v207
  %v209 = vpop.f32.mrf.mxu0
  %v210 = vadd.f32 %v84, %v209
  %211 = vdwg.mxu0
  %v212 = vmax.f32 %v141, 0.0
  %v213 = vmax.f32 %v143, 0.0
  %v214 = vmax.f32 %v194, 0.0
  %v215 = vmax.f32 %v196, 0.0
  %v216 = vmax.f32 %v145, 0.0
  %v217 = vmax.f32 %v147, 0.0
  %v218 = vmax.f32 %v198, 0.0
  %v219 = vmax.f32 %v200, 0.0
  %v220 = vmax.f32 %v151, 0.0
  %v221 = vmax.f32 %v153, 0.0
  %v222 = vmax.f32 %v204, 0.0
  %v223 = vmax.f32 %v206, 0.0
  %v224 = vmax.f32 %v155, 0.0
  %v225 = vmax.f32 %v157, 0.0
  %v226 = vmax.f32 %v208, 0.0
  %v227 = vmax.f32 %v210, 0.0
  %v228 = vld [vmem:[%s3] sm:$0xff]
  %v229 = vld [vmem:[%s3 + $0x8] sm:$0xff]
  %v230 = vpack.c.bf16 %v229, %v228
  %v231 = vpack.c.bf16 %v216, %v212
  %v232 = vpack.c.bf16 %v217, %v213
  %v233 = vpack.c.bf16 %v218, %v214
  %v234 = vpack.c.bf16 %v219, %v215
  %v235 = vpack.c.bf16 %v224, %v220
  %v236 = vpack.c.bf16 %v225, %v221
  %v237 = vpack.c.bf16 %v226, %v222
  %v238 = vpack.c.bf16 %v227, %v223
  %v239 = vld [vmem:[%s4] sm:$0xff]
  %v240 = vld [vmem:[%s4 + $0x8] sm:$0xff]
  %242 = vset.pattern.permute.xlu0 0
  %243 = vperm.xlu0 %242, %v239
  %v244 = vpop.permute.xlu0 %243
  %247 = vset.pattern.permute.xlu0 0
  %248 = vperm.xlu0 %247, %v240
  %v249 = vpop.permute.xlu0 %248
  %vm251 = vcmask 261120
  %v253 = vsel %vm251, %v230, 0
  %255 = vmatprep.subr.bf16.mxu0 0
  %256 = vmatpush1.bf16.msra.mxu0 0
  %257 = vmatprep.subr.bf16.mxu0 0
  %258 = vmatpush1.bf16.msra.mxu0 0
  %259 = vmatprep.subr.bf16.mxu0 0
  %260 = vmatpush1.bf16.msra.mxu0 0
  %261 = vmatprep.subr.bf16.mxu0 0
  %262 = vmatpush1.bf16.msra.mxu0 0
  %263 = vmatprep.subr.bf16.mxu0 0
  %264 = vmatpush1.bf16.msra.mxu0 0
  %265 = vmatprep.subr.bf16.mxu0 0
  %266 = vmatpush1.bf16.msra.mxu0 0
  %267 = vmatprep.subr.bf16.mxu0 %v236
  %268 = vmatpush1.bf16.msra.mxu0 %v235
  %269 = vmatprep.subr.bf16.mxu0 %v232
  %270 = vmatpush1.bf16.msra.mxu0 %v231
  %271 = vmatprep.subr.bf16.mxu0 0
  %272 = vmatpush2.bf16.msra.mxu0 0
  %273 = vmatprep.subr.bf16.mxu0 0
  %274 = vmatpush2.bf16.msra.mxu0 0
  %275 = vmatprep.subr.bf16.mxu0 0
  %276 = vmatpush2.bf16.msra.mxu0 0
  %277 = vmatprep.subr.bf16.mxu0 0
  %278 = vmatpush2.bf16.msra.mxu0 0
  %279 = vmatprep.subr.bf16.mxu0 0
  %280 = vmatpush2.bf16.msra.mxu0 0
  %281 = vmatprep.subr.bf16.mxu0 0
  %282 = vmatpush2.bf16.msra.mxu0 0
  %283 = vmatprep.subr.bf16.mxu0 0
  %284 = vmatpush2.bf16.msra.mxu0 0
  %285 = vmatprep.subr.bf16.mxu0 0
  %286 = vmatpush2.bf16.msra.mxu0 0
  %287 = vmatprep.mubr.bf16.mxu0 0
  %288 = vmatmul.mubr.bf16.gmra.mxu0 %v253
  %v289 = vpop.f32.mrf.mxu0
  %v290 = vadd.f32 %v244, %v289
  %v291 = vpop.f32.mrf.mxu0
  %v292 = vadd.f32 %v244, %v291
  %v293 = vpop.f32.mrf.mxu0
  %v294 = vadd.f32 %v249, %v293
  %v295 = vpop.f32.mrf.mxu0
  %v296 = vadd.f32 %v249, %v295
  %297 = vdwg.mxu0
  %298 = vmatprep.subr.bf16.mxu0 0
  %299 = vmatpush1.bf16.msra.mxu0 0
  %300 = vmatprep.subr.bf16.mxu0 0
  %301 = vmatpush1.bf16.msra.mxu0 0
  %302 = vmatprep.subr.bf16.mxu0 0
  %303 = vmatpush1.bf16.msra.mxu0 0
  %304 = vmatprep.subr.bf16.mxu0 0
  %305 = vmatpush1.bf16.msra.mxu0 0
  %306 = vmatprep.subr.bf16.mxu0 0
  %307 = vmatpush1.bf16.msra.mxu0 0
  %308 = vmatprep.subr.bf16.mxu0 0
  %309 = vmatpush1.bf16.msra.mxu0 0
  %310 = vmatprep.subr.bf16.mxu0 %v238
  %311 = vmatpush1.bf16.msra.mxu0 %v237
  %312 = vmatprep.subr.bf16.mxu0 %v234
  %313 = vmatpush1.bf16.msra.mxu0 %v233
  %314 = vmatprep.subr.bf16.mxu0 0
  %315 = vmatpush2.bf16.msra.mxu0 0
  %316 = vmatprep.subr.bf16.mxu0 0
  %317 = vmatpush2.bf16.msra.mxu0 0
  %318 = vmatprep.subr.bf16.mxu0 0
  %319 = vmatpush2.bf16.msra.mxu0 0
  %320 = vmatprep.subr.bf16.mxu0 0
  %321 = vmatpush2.bf16.msra.mxu0 0
  %322 = vmatprep.subr.bf16.mxu0 0
  %323 = vmatpush2.bf16.msra.mxu0 0
  %324 = vmatprep.subr.bf16.mxu0 0
  %325 = vmatpush2.bf16.msra.mxu0 0
  %326 = vmatprep.subr.bf16.mxu0 0
  %327 = vmatpush2.bf16.msra.mxu0 0
  %328 = vmatprep.subr.bf16.mxu0 0
  %329 = vmatpush2.bf16.msra.mxu0 0
  %330 = vmatprep.mubr.bf16.mxu0 0
  %331 = vmatmul.mubr.bf16.gmra.mxu0 %v253
  %v332 = vpop.f32.mrf.mxu0
  %v333 = vadd.f32 %v244, %v332
  %v334 = vpop.f32.mrf.mxu0
  %v335 = vadd.f32 %v244, %v334
  %v336 = vpop.f32.mrf.mxu0
  %v337 = vadd.f32 %v249, %v336
  %v338 = vpop.f32.mrf.mxu0
  %v339 = vadd.f32 %v249, %v338
  %340 = vdwg.mxu0
  %v341 = vld [vmem:[%s5] sm:$0xff]
  %v342 = vmul.f32 %v290, %v290
  %v343 = vmul.f32 %v292, %v292
  %v344 = vmul.f32 %v333, %v333
  %v345 = vmul.f32 %v335, %v335
  %v346 = vmul.f32 %v294, %v294
  %v347 = vmul.f32 %v296, %v296
  %v348 = vmul.f32 %v337, %v337
  %v349 = vmul.f32 %v339, %v339
  %v350 = vadd.f32 %v342, %v346
  %v351 = vrot.slane %v350, 4
  %v352 = vadd.f32 %v350, %v351
  %v353 = vrot.slane %v352, 2
  %v354 = vadd.f32 %v352, %v353
  %v355 = vrot.slane %v354, 1
  %v356 = vadd.f32 %v354, %v355
  %v357 = vadd.f32 %v343, %v347
  %v358 = vrot.slane %v357, 4
  %v359 = vadd.f32 %v357, %v358
  %v360 = vrot.slane %v359, 2
  %v361 = vadd.f32 %v359, %v360
  %v362 = vrot.slane %v361, 1
  %v363 = vadd.f32 %v361, %v362
  %v364 = vadd.f32 %v344, %v348
  %v365 = vrot.slane %v364, 4
  %v366 = vadd.f32 %v364, %v365
  %v367 = vrot.slane %v366, 2
  %v368 = vadd.f32 %v366, %v367
  %v369 = vrot.slane %v368, 1
  %v370 = vadd.f32 %v368, %v369
  %v371 = vadd.f32 %v345, %v349
  %v372 = vrot.slane %v371, 4
  %v373 = vadd.f32 %v371, %v372
  %v374 = vrot.slane %v373, 2
  %v375 = vadd.f32 %v373, %v374
  %v376 = vrot.slane %v375, 1
  %v377 = vadd.f32 %v375, %v376
  %vm378 = vcmask 130048
  %v380 = vsel %vm378, %v341, 0
  %382 = vmatprep.subr.mxu0 0.0
  %383 = vmatpush1.msra.mxu0 0.0
  %384 = vmatprep.subr.mxu0 0.0
  %385 = vmatpush1.msra.mxu0 0.0
  %386 = vmatprep.subr.mxu0 0.0
  %387 = vmatpush1.msra.mxu0 0.0
  %388 = vmatprep.subr.mxu0 0.0
  %389 = vmatpush1.msra.mxu0 0.0
  %390 = vmatprep.subr.mxu0 0.0
  %391 = vmatpush1.msra.mxu0 0.0
  %392 = vmatprep.subr.mxu0 0.0
  %393 = vmatpush1.msra.mxu0 0.0
  %394 = vmatprep.subr.mxu0 0.0
  %395 = vmatpush1.msra.mxu0 0.0
  %396 = vmatprep.subr.mxu0 0.0
  %397 = vmatpush1.msra.mxu0 0.0
  %398 = vmatprep.subr.mxu0 0.0
  %399 = vmatpush1.msra.mxu0 0.0
  %400 = vmatprep.subr.mxu0 0.0
  %401 = vmatpush1.msra.mxu0 0.0
  %402 = vmatprep.subr.mxu0 0.0
  %403 = vmatpush1.msra.mxu0 0.0
  %404 = vmatprep.subr.mxu0 0.0
  %405 = vmatpush1.msra.mxu0 0.0
  %406 = vmatprep.subr.mxu0 0.0
  %407 = vmatpush1.msra.mxu0 0.0
  %408 = vmatprep.subr.mxu0 0.0
  %409 = vmatpush1.msra.mxu0 0.0
  %410 = vmatprep.subr.mxu0 %v296
  %411 = vmatpush1.msra.mxu0 %v294
  %412 = vmatprep.subr.mxu0 %v292
  %413 = vmatpush1.msra.mxu0 %v290
  %414 = vmatprep.subr.mxu0 0.0
  %415 = vmatpush2.msra.mxu0 0.0
  %416 = vmatprep.subr.mxu0 0.0
  %417 = vmatpush2.msra.mxu0 0.0
  %418 = vmatprep.subr.mxu0 0.0
  %419 = vmatpush2.msra.mxu0 0.0
  %420 = vmatprep.subr.mxu0 0.0
  %421 = vmatpush2.msra.mxu0 0.0
  %422 = vmatprep.subr.mxu0 0.0
  %423 = vmatpush2.msra.mxu0 0.0
  %424 = vmatprep.subr.mxu0 0.0
  %425 = vmatpush2.msra.mxu0 0.0
  %426 = vmatprep.subr.mxu0 0.0
  %427 = vmatpush2.msra.mxu0 0.0
  %428 = vmatprep.subr.mxu0 0.0
  %429 = vmatpush2.msra.mxu0 0.0
  %430 = vmatprep.subr.mxu0 0.0
  %431 = vmatpush2.msra.mxu0 0.0
  %432 = vmatprep.subr.mxu0 0.0
  %433 = vmatpush2.msra.mxu0 0.0
  %434 = vmatprep.subr.mxu0 0.0
  %435 = vmatpush2.msra.mxu0 0.0
  %436 = vmatprep.subr.mxu0 0.0
  %437 = vmatpush2.msra.mxu0 0.0
  %438 = vmatprep.subr.mxu0 0.0
  %439 = vmatpush2.msra.mxu0 0.0
  %440 = vmatprep.subr.mxu0 0.0
  %441 = vmatpush2.msra.mxu0 0.0
  %442 = vmatprep.subr.mxu0 0.0
  %443 = vmatpush2.msra.mxu0 0.0
  %444 = vmatprep.subr.mxu0 0.0
  %445 = vmatpush2.msra.mxu0 0.0
  %446 = vmatprep.mubr.f32.mxu0 0.0
  %447 = vmatmul.mubr.f32.gmra.mxu0 %v380
  %v448 = vpop.f32.mrf.mxu0
  %v449 = vadd.f32 0.0, %v448
  %v450 = vpop.f32.mrf.mxu0
  %v451 = vadd.f32 0.0, %v450
  %452 = vdwg.mxu0
  %453 = vmatprep.subr.mxu0 0.0
  %454 = vmatpush1.msra.mxu0 0.0
  %455 = vmatprep.subr.mxu0 0.0
  %456 = vmatpush1.msra.mxu0 0.0
  %457 = vmatprep.subr.mxu0 0.0
  %458 = vmatpush1.msra.mxu0 0.0
  %459 = vmatprep.subr.mxu0 0.0
  %460 = vmatpush1.msra.mxu0 0.0
  %461 = vmatprep.subr.mxu0 0.0
  %462 = vmatpush1.msra.mxu0 0.0
  %463 = vmatprep.subr.mxu0 0.0
  %464 = vmatpush1.msra.mxu0 0.0
  %465 = vmatprep.subr.mxu0 0.0
  %466 = vmatpush1.msra.mxu0 0.0
  %467 = vmatprep.subr.mxu0 0.0
  %468 = vmatpush1.msra.mxu0 0.0
  %469 = vmatprep.subr.mxu0 0.0
  %470 = vmatpush1.msra.mxu0 0.0
  %471 = vmatprep.subr.mxu0 0.0
  %472 = vmatpush1.msra.mxu0 0.0
  %473 = vmatprep.subr.mxu0 0.0
  %474 = vmatpush1.msra.mxu0 0.0
  %475 = vmatprep.subr.mxu0 0.0
  %476 = vmatpush1.msra.mxu0 0.0
  %477 = vmatprep.subr.mxu0 0.0
  %478 = vmatpush1.msra.mxu0 0.0
  %479 = vmatprep.subr.mxu0 0.0
  %480 = vmatpush1.msra.mxu0 0.0
  %481 = vmatprep.subr.mxu0 %v339
  %482 = vmatpush1.msra.mxu0 %v337
  %483 = vmatprep.subr.mxu0 %v335
  %484 = vmatpush1.msra.mxu0 %v333
  %485 = vmatprep.subr.mxu0 0.0
  %486 = vmatpush2.msra.mxu0 0.0
  %487 = vmatprep.subr.mxu0 0.0
  %488 = vmatpush2.msra.mxu0 0.0
  %489 = vmatprep.subr.mxu0 0.0
  %490 = vmatpush2.msra.mxu0 0.0
  %491 = vmatprep.subr.mxu0 0.0
  %492 = vmatpush2.msra.mxu0 0.0
  %493 = vmatprep.subr.mxu0 0.0
  %494 = vmatpush2.msra.mxu0 0.0
  %495 = vmatprep.subr.mxu0 0.0
  %496 = vmatpush2.msra.mxu0 0.0
  %497 = vmatprep.subr.mxu0 0.0
  %498 = vmatpush2.msra.mxu0 0.0
  %499 = vmatprep.subr.mxu0 0.0
  %500 = vmatpush2.msra.mxu0 0.0
  %501 = vmatprep.subr.mxu0 0.0
  %502 = vmatpush2.msra.mxu0 0.0
  %503 = vmatprep.subr.mxu0 0.0
  %504 = vmatpush2.msra.mxu0 0.0
  %505 = vmatprep.subr.mxu0 0.0
  %506 = vmatpush2.msra.mxu0 0.0
  %507 = vmatprep.subr.mxu0 0.0
  %508 = vmatpush2.msra.mxu0 0.0
  %509 = vmatprep.subr.mxu0 0.0
  %510 = vmatpush2.msra.mxu0 0.0
  %511 = vmatprep.subr.mxu0 0.0
  %512 = vmatpush2.msra.mxu0 0.0
  %513 = vmatprep.subr.mxu0 0.0
  %514 = vmatpush2.msra.mxu0 0.0
  %515 = vmatprep.subr.mxu0 0.0
  %516 = vmatpush2.msra.mxu0 0.0
  %517 = vmatprep.mubr.f32.mxu0 0.0
  %518 = vmatmul.mubr.f32.gmra.mxu0 %v380
  %v519 = vpop.f32.mrf.mxu0
  %v520 = vadd.f32 0.0, %v519
  %v521 = vpop.f32.mrf.mxu0
  %v522 = vadd.f32 0.0, %v521
  %523 = vdwg.mxu0
  %v524 = vld [vmem:[%s7] sm:$0xff]
  %526 = vset.pattern.permute.xlu0 0
  %527 = vperm.xlu0 %526, %v524
  %v528 = vpop.permute.xlu0 %527
  %v530 = vadd.f32 %v356, %v528
  %v531 = vadd.f32 %v363, %v528
  %v532 = vadd.f32 %v370, %v528
  %v533 = vadd.f32 %v377, %v528
  %v534 = vmul.f32 %v449, 2.0
  %v535 = vmul.f32 %v451, 2.0
  %v536 = vmul.f32 %v520, 2.0
  %v537 = vmul.f32 %v522, 2.0
  %v538 = vsub.f32 %v530, %v534
  %v539 = vsub.f32 %v531, %v535
  %v540 = vsub.f32 %v532, %v536
  %v541 = vsub.f32 %v533, %v537
  %v542 = vlaneseq
  %v543 = vshrl.u32 %v542, 7
  %v544 = vrot.slane %v538, 4
  %v545 = vmin.f32 %v538, %v544
  %v546 = vrot.slane %v545, 2
  %v547 = vmin.f32 %v545, %v546
  %v548 = vrot.slane %v547, 1
  %v549 = vmin.f32 %v547, %v548
  %v550 = vrot.slane %v539, 4
  %v551 = vmin.f32 %v539, %v550
  %v552 = vrot.slane %v551, 2
  %v553 = vmin.f32 %v551, %v552
  %v554 = vrot.slane %v553, 1
  %v555 = vmin.f32 %v553, %v554
  %v556 = vrot.slane %v540, 4
  %v557 = vmin.f32 %v540, %v556
  %v558 = vrot.slane %v557, 2
  %v559 = vmin.f32 %v557, %v558
  %v560 = vrot.slane %v559, 1
  %v561 = vmin.f32 %v559, %v560
  %v562 = vrot.slane %v541, 4
  %v563 = vmin.f32 %v541, %v562
  %v564 = vrot.slane %v563, 2
  %v565 = vmin.f32 %v563, %v564
  %v566 = vrot.slane %v565, 1
  %v567 = vmin.f32 %v565, %v566
  %vm568 = vcmp.eq.f32.partialorder %v538, %v549
  %vm569 = vcmp.eq.f32.partialorder %v539, %v555
  %vm570 = vcmp.eq.f32.partialorder %v540, %v561
  %vm571 = vcmp.eq.f32.partialorder %v541, %v567
  %v572 = vsel %vm568, %v543, 8
  %v573 = vsel %vm569, %v543, 8
  %v574 = vsel %vm570, %v543, 8
  %v575 = vsel %vm571, %v543, 8
  %v576 = vrot.slane %v572, 4
  %vm577 = vcmp.lt.s32.totalorder %v572, %v576
  %v578 = vsel %vm577, %v572, %v576
  %v579 = vrot.slane %v578, 2
  %vm580 = vcmp.lt.s32.totalorder %v578, %v579
  %v581 = vsel %vm580, %v578, %v579
  %v582 = vrot.slane %v581, 1
  %vm583 = vcmp.lt.s32.totalorder %v581, %v582
  %v584 = vsel %vm583, %v581, %v582
  %v585 = vrot.slane %v573, 4
  %vm586 = vcmp.lt.s32.totalorder %v573, %v585
  %v587 = vsel %vm586, %v573, %v585
  %v588 = vrot.slane %v587, 2
  %vm589 = vcmp.lt.s32.totalorder %v587, %v588
  %v590 = vsel %vm589, %v587, %v588
  %v591 = vrot.slane %v590, 1
  %vm592 = vcmp.lt.s32.totalorder %v590, %v591
  %v593 = vsel %vm592, %v590, %v591
  %v594 = vrot.slane %v574, 4
  %vm595 = vcmp.lt.s32.totalorder %v574, %v594
  %v596 = vsel %vm595, %v574, %v594
  %v597 = vrot.slane %v596, 2
  %vm598 = vcmp.lt.s32.totalorder %v596, %v597
  %v599 = vsel %vm598, %v596, %v597
  %v600 = vrot.slane %v599, 1
  %vm601 = vcmp.lt.s32.totalorder %v599, %v600
  %v602 = vsel %vm601, %v599, %v600
  %v603 = vrot.slane %v575, 4
  %vm604 = vcmp.lt.s32.totalorder %v575, %v603
  %v605 = vsel %vm604, %v575, %v603
  %v606 = vrot.slane %v605, 2
  %vm607 = vcmp.lt.s32.totalorder %v605, %v606
  %v608 = vsel %vm607, %v605, %v606
  %v609 = vrot.slane %v608, 1
  %vm610 = vcmp.lt.s32.totalorder %v608, %v609
  %v611 = vsel %vm610, %v608, %v609
  %vm612 = vcmp.eq.s32.totalorder %v543, %v584
  %vm613 = vcmp.eq.s32.totalorder %v543, %v593
  %vm614 = vcmp.eq.s32.totalorder %v543, %v602
  %vm615 = vcmp.eq.s32.totalorder %v543, %v611
  %v616 = vsel %vm612, 1, 0
  %v617 = vsel %vm613, 1, 0
  %v618 = vsel %vm614, 1, 0
  %v619 = vsel %vm615, 1, 0
  %v620 = vcvt.s32.f32 %v616
  %v621 = vcvt.s32.f32 %v617
  %v622 = vcvt.s32.f32 %v618
  %v623 = vcvt.s32.f32 %v619
  %v624 = vld [vmem:[%s6] sm:$0xff]
  %v625 = vld [vmem:[%s6 + $0x8] sm:$0xff]
  %vm626 = vcmask 64512
  %v628 = vsel %vm626, %v624, 0
  %v631 = vsel %vm626, %v625, 0
  %633 = vmatprep.subr.mxu0 0.0
  %634 = vmatpush1.msra.mxu0 0.0
  %635 = vmatprep.subr.mxu0 0.0
  %636 = vmatpush1.msra.mxu0 0.0
  %637 = vmatprep.subr.mxu0 0.0
  %638 = vmatpush1.msra.mxu0 0.0
  %639 = vmatprep.subr.mxu0 0.0
  %640 = vmatpush1.msra.mxu0 0.0
  %641 = vmatprep.subr.mxu0 0.0
  %642 = vmatpush1.msra.mxu0 0.0
  %643 = vmatprep.subr.mxu0 0.0
  %644 = vmatpush1.msra.mxu0 0.0
  %645 = vmatprep.subr.mxu0 0.0
  %646 = vmatpush1.msra.mxu0 0.0
  %647 = vmatprep.subr.mxu0 0.0
  %648 = vmatpush1.msra.mxu0 0.0
  %649 = vmatprep.subr.mxu0 0.0
  %650 = vmatpush1.msra.mxu0 0.0
  %651 = vmatprep.subr.mxu0 0.0
  %652 = vmatpush1.msra.mxu0 0.0
  %653 = vmatprep.subr.mxu0 0.0
  %654 = vmatpush1.msra.mxu0 0.0
  %655 = vmatprep.subr.mxu0 0.0
  %656 = vmatpush1.msra.mxu0 0.0
  %657 = vmatprep.subr.mxu0 0.0
  %658 = vmatpush1.msra.mxu0 0.0
  %659 = vmatprep.subr.mxu0 0.0
  %660 = vmatpush1.msra.mxu0 0.0
  %661 = vmatprep.subr.mxu0 0.0
  %662 = vmatpush1.msra.mxu0 0.0
  %663 = vmatprep.subr.mxu0 %v621
  %664 = vmatpush1.msra.mxu0 %v620
  %665 = vmatprep.subr.mxu0 0.0
  %666 = vmatpush2.msra.mxu0 0.0
  %667 = vmatprep.subr.mxu0 0.0
  %668 = vmatpush2.msra.mxu0 0.0
  %669 = vmatprep.subr.mxu0 0.0
  %670 = vmatpush2.msra.mxu0 0.0
  %671 = vmatprep.subr.mxu0 0.0
  %672 = vmatpush2.msra.mxu0 0.0
  %673 = vmatprep.subr.mxu0 0.0
  %674 = vmatpush2.msra.mxu0 0.0
  %675 = vmatprep.subr.mxu0 0.0
  %676 = vmatpush2.msra.mxu0 0.0
  %677 = vmatprep.subr.mxu0 0.0
  %678 = vmatpush2.msra.mxu0 0.0
  %679 = vmatprep.subr.mxu0 0.0
  %680 = vmatpush2.msra.mxu0 0.0
  %681 = vmatprep.subr.mxu0 0.0
  %682 = vmatpush2.msra.mxu0 0.0
  %683 = vmatprep.subr.mxu0 0.0
  %684 = vmatpush2.msra.mxu0 0.0
  %685 = vmatprep.subr.mxu0 0.0
  %686 = vmatpush2.msra.mxu0 0.0
  %687 = vmatprep.subr.mxu0 0.0
  %688 = vmatpush2.msra.mxu0 0.0
  %689 = vmatprep.subr.mxu0 0.0
  %690 = vmatpush2.msra.mxu0 0.0
  %691 = vmatprep.subr.mxu0 0.0
  %692 = vmatpush2.msra.mxu0 0.0
  %693 = vmatprep.subr.mxu0 0.0
  %694 = vmatpush2.msra.mxu0 0.0
  %695 = vmatprep.subr.mxu0 0.0
  %696 = vmatpush2.msra.mxu0 0.0
  %697 = vmatprep.mubr.f32.mxu0 0.0
  %698 = vmatmul.mubr.f32.gmra.mxu0 %v628
  %v699 = vpop.f32.mrf.mxu0
  %v700 = vadd.f32 0.0, %v699
  %v701 = vpop.f32.mrf.mxu0
  %v702 = vadd.f32 0.0, %v701
  %703 = vmatprep.mubr.f32.mxu0 0.0
  %704 = vmatmul.mubr.f32.gmra.mxu0 %v631
  %v705 = vpop.f32.mrf.mxu0
  %v706 = vadd.f32 0.0, %v705
  %v707 = vpop.f32.mrf.mxu0
  %v708 = vadd.f32 0.0, %v707
  %709 = vdwg.mxu0
  %710 = vmatprep.subr.mxu0 0.0
  %711 = vmatpush1.msra.mxu0 0.0
  %712 = vmatprep.subr.mxu0 0.0
  %713 = vmatpush1.msra.mxu0 0.0
  %714 = vmatprep.subr.mxu0 0.0
  %715 = vmatpush1.msra.mxu0 0.0
  %716 = vmatprep.subr.mxu0 0.0
  %717 = vmatpush1.msra.mxu0 0.0
  %718 = vmatprep.subr.mxu0 0.0
  %719 = vmatpush1.msra.mxu0 0.0
  %720 = vmatprep.subr.mxu0 0.0
  %721 = vmatpush1.msra.mxu0 0.0
  %722 = vmatprep.subr.mxu0 0.0
  %723 = vmatpush1.msra.mxu0 0.0
  %724 = vmatprep.subr.mxu0 0.0
  %725 = vmatpush1.msra.mxu0 0.0
  %726 = vmatprep.subr.mxu0 0.0
  %727 = vmatpush1.msra.mxu0 0.0
  %728 = vmatprep.subr.mxu0 0.0
  %729 = vmatpush1.msra.mxu0 0.0
  %730 = vmatprep.subr.mxu0 0.0
  %731 = vmatpush1.msra.mxu0 0.0
  %732 = vmatprep.subr.mxu0 0.0
  %733 = vmatpush1.msra.mxu0 0.0
  %734 = vmatprep.subr.mxu0 0.0
  %735 = vmatpush1.msra.mxu0 0.0
  %736 = vmatprep.subr.mxu0 0.0
  %737 = vmatpush1.msra.mxu0 0.0
  %738 = vmatprep.subr.mxu0 0.0
  %739 = vmatpush1.msra.mxu0 0.0
  %740 = vmatprep.subr.mxu0 %v623
  %741 = vmatpush1.msra.mxu0 %v622
  %742 = vmatprep.subr.mxu0 0.0
  %743 = vmatpush2.msra.mxu0 0.0
  %744 = vmatprep.subr.mxu0 0.0
  %745 = vmatpush2.msra.mxu0 0.0
  %746 = vmatprep.subr.mxu0 0.0
  %747 = vmatpush2.msra.mxu0 0.0
  %748 = vmatprep.subr.mxu0 0.0
  %749 = vmatpush2.msra.mxu0 0.0
  %750 = vmatprep.subr.mxu0 0.0
  %751 = vmatpush2.msra.mxu0 0.0
  %752 = vmatprep.subr.mxu0 0.0
  %753 = vmatpush2.msra.mxu0 0.0
  %754 = vmatprep.subr.mxu0 0.0
  %755 = vmatpush2.msra.mxu0 0.0
  %756 = vmatprep.subr.mxu0 0.0
  %757 = vmatpush2.msra.mxu0 0.0
  %758 = vmatprep.subr.mxu0 0.0
  %759 = vmatpush2.msra.mxu0 0.0
  %760 = vmatprep.subr.mxu0 0.0
  %761 = vmatpush2.msra.mxu0 0.0
  %762 = vmatprep.subr.mxu0 0.0
  %763 = vmatpush2.msra.mxu0 0.0
  %764 = vmatprep.subr.mxu0 0.0
  %765 = vmatpush2.msra.mxu0 0.0
  %766 = vmatprep.subr.mxu0 0.0
  %767 = vmatpush2.msra.mxu0 0.0
  %768 = vmatprep.subr.mxu0 0.0
  %769 = vmatpush2.msra.mxu0 0.0
  %770 = vmatprep.subr.mxu0 0.0
  %771 = vmatpush2.msra.mxu0 0.0
  %772 = vmatprep.subr.mxu0 0.0
  %773 = vmatpush2.msra.mxu0 0.0
  %774 = vmatprep.mubr.f32.mxu0 0.0
  %775 = vmatmul.mubr.f32.gmra.mxu0 %v628
  %v776 = vpop.f32.mrf.mxu0
  %v777 = vadd.f32 0.0, %v776
  %v778 = vpop.f32.mrf.mxu0
  %v779 = vadd.f32 0.0, %v778
  %780 = vmatprep.mubr.f32.mxu0 0.0
  %781 = vmatmul.mubr.f32.gmra.mxu0 %v631
  %v782 = vpop.f32.mrf.mxu0
  %v783 = vadd.f32 0.0, %v782
  %v784 = vpop.f32.mrf.mxu0
  %v785 = vadd.f32 0.0, %v784
  %786 = vdwg.mxu0
  %v787 = vlaneseq
  %v788 = vand.u32 %v787, 127
  %v789 = vadd.s32 %v788, 128
  %v790 = vadd.s32 %v788, 256
  %v791 = vadd.s32 %v788, 384
  %s792 = smul.u32 0, 512
  %v793 = vstv %s792
  %v794 = vadd.s32 %v788, %v793
  %v795 = vadd.s32 %v789, %v793
  %v796 = vadd.s32 %v790, %v793
  %v797 = vadd.s32 %v791, %v793
  %vm798 = vcmp.lt.s32.totalorder %v794, 512
  %vm799 = vcmp.lt.s32.totalorder %v795, 512
  %vm800 = vcmp.lt.s32.totalorder %v796, 512
  %vm801 = vcmp.lt.s32.totalorder %v797, 512
  %v802 = vsel %vm798, 1, 0
  %v803 = vsel %vm799, 1, 0
  %v804 = vsel %vm800, 1, 0
  %v805 = vsel %vm801, 1, 0
  %v806 = vcvt.s32.f32 %v802
  %v807 = vcvt.s32.f32 %v803
  %v808 = vcvt.s32.f32 %v804
  %v809 = vcvt.s32.f32 %v805
  %v810 = vsub.f32 %v700, %v290
  %v811 = vsub.f32 %v702, %v292
  %v812 = vsub.f32 %v777, %v333
  %v813 = vsub.f32 %v779, %v335
  %v814 = vsub.f32 %v706, %v294
  %v815 = vsub.f32 %v708, %v296
  %v816 = vsub.f32 %v783, %v337
  %v817 = vsub.f32 %v785, %v339
  %v818 = vmul.f32 %v810, %v806
  %v819 = vmul.f32 %v811, %v807
  %v820 = vmul.f32 %v812, %v808
  %v821 = vmul.f32 %v813, %v809
  %v822 = vmul.f32 %v814, %v806
  %v823 = vmul.f32 %v815, %v807
  %v824 = vmul.f32 %v816, %v808
  %v825 = vmul.f32 %v817, %v809
  %v826 = vmul.f32 %v818, %v818
  %v827 = vmul.f32 %v819, %v819
  %v828 = vmul.f32 %v820, %v820
  %v829 = vmul.f32 %v821, %v821
  %v830 = vmul.f32 %v822, %v822
  %v831 = vmul.f32 %v823, %v823
  %v832 = vmul.f32 %v824, %v824
  %v833 = vmul.f32 %v825, %v825
  %v834 = vadd.f32 %v826, %v827
  %v835 = vadd.f32 %v834, %v828
  %v836 = vadd.f32 %v835, %v829
  %v837 = vadd.f32 %v836, %v830
  %v838 = vadd.f32 %v837, %v831
  %v839 = vadd.f32 %v838, %v832
  %v840 = vadd.f32 %v839, %v833
  %841 = vadd.xlane.f32.xlu0 %v840
  %v842 = vpop.xlane.xlu0 %841
  %v843 = vrot.slane %v842, 4
  %v844 = vadd.f32 %v842, %v843
  %v845 = vrot.slane %v844, 2
  %v846 = vadd.f32 %v844, %v845
  %v847 = vrot.slane %v846, 1
  %v848 = vadd.f32 %v846, %v847
  %s849 = vtos %v848
  %v850 = vstv %s849
  %v851 = vadd.f32 %v850, 0.0
  %852 = vst [vmem:[%s13] sm:$0xff] %v851
  %v853 = vmax.f32 %v700, 0.0
  %v854 = vmax.f32 %v702, 0.0
  %v855 = vmax.f32 %v777, 0.0
  %v856 = vmax.f32 %v779, 0.0
  %v857 = vmax.f32 %v706, 0.0
  %v858 = vmax.f32 %v708, 0.0
  %v859 = vmax.f32 %v783, 0.0
  %v860 = vmax.f32 %v785, 0.0
  %v861 = vld [vmem:[%s8] sm:$0xff]
  %v862 = vld [vmem:[%s8 + $0x8] sm:$0xff]
  %v863 = vld [vmem:[%s8 + $0x10] sm:$0xff]
  %v864 = vld [vmem:[%s8 + $0x18] sm:$0xff]
  %v865 = vpack.c.bf16 %v862, %v861
  %v866 = vpack.c.bf16 %v864, %v863
  %v867 = vpack.c.bf16 %v857, %v853
  %v868 = vpack.c.bf16 %v858, %v854
  %v869 = vpack.c.bf16 %v859, %v855
  %v870 = vpack.c.bf16 %v860, %v856
  %v871 = vld [vmem:[%s9] sm:$0xff]
  %v872 = vld [vmem:[%s9 + $0x8] sm:$0xff]
  %v873 = vld [vmem:[%s9 + $0x10] sm:$0xff]
  %v874 = vld [vmem:[%s9 + $0x18] sm:$0xff]
  %876 = vset.pattern.permute.xlu0 0
  %877 = vperm.xlu0 %876, %v871
  %v878 = vpop.permute.xlu0 %877
  %881 = vset.pattern.permute.xlu0 0
  %882 = vperm.xlu0 %881, %v872
  %v883 = vpop.permute.xlu0 %882
  %886 = vset.pattern.permute.xlu0 0
  %887 = vperm.xlu0 %886, %v873
  %v888 = vpop.permute.xlu0 %887
  %891 = vset.pattern.permute.xlu0 0
  %892 = vperm.xlu0 %891, %v874
  %v893 = vpop.permute.xlu0 %892
  %v896 = vsel %vm378, %v865, 0
  %v899 = vsel %vm378, %v866, 0
  %901 = vmatprep.subr.bf16.mxu0 0
  %902 = vmatpush1.bf16.msra.mxu0 0
  %903 = vmatprep.subr.bf16.mxu0 0
  %904 = vmatpush1.bf16.msra.mxu0 0
  %905 = vmatprep.subr.bf16.mxu0 0
  %906 = vmatpush1.bf16.msra.mxu0 0
  %907 = vmatprep.subr.bf16.mxu0 0
  %908 = vmatpush1.bf16.msra.mxu0 0
  %909 = vmatprep.subr.bf16.mxu0 0
  %910 = vmatpush1.bf16.msra.mxu0 0
  %911 = vmatprep.subr.bf16.mxu0 0
  %912 = vmatpush1.bf16.msra.mxu0 0
  %913 = vmatprep.subr.bf16.mxu0 0
  %914 = vmatpush1.bf16.msra.mxu0 0
  %915 = vmatprep.subr.bf16.mxu0 %v868
  %916 = vmatpush1.bf16.msra.mxu0 %v867
  %917 = vmatprep.subr.bf16.mxu0 0
  %918 = vmatpush2.bf16.msra.mxu0 0
  %919 = vmatprep.subr.bf16.mxu0 0
  %920 = vmatpush2.bf16.msra.mxu0 0
  %921 = vmatprep.subr.bf16.mxu0 0
  %922 = vmatpush2.bf16.msra.mxu0 0
  %923 = vmatprep.subr.bf16.mxu0 0
  %924 = vmatpush2.bf16.msra.mxu0 0
  %925 = vmatprep.subr.bf16.mxu0 0
  %926 = vmatpush2.bf16.msra.mxu0 0
  %927 = vmatprep.subr.bf16.mxu0 0
  %928 = vmatpush2.bf16.msra.mxu0 0
  %929 = vmatprep.subr.bf16.mxu0 0
  %930 = vmatpush2.bf16.msra.mxu0 0
  %931 = vmatprep.subr.bf16.mxu0 0
  %932 = vmatpush2.bf16.msra.mxu0 0
  %933 = vmatprep.mubr.bf16.mxu0 0
  %934 = vmatmul.mubr.bf16.gmra.mxu0 %v896
  %v935 = vpop.f32.mrf.mxu0
  %v936 = vadd.f32 %v878, %v935
  %v937 = vpop.f32.mrf.mxu0
  %v938 = vadd.f32 %v878, %v937
  %v939 = vpop.f32.mrf.mxu0
  %v940 = vadd.f32 %v883, %v939
  %v941 = vpop.f32.mrf.mxu0
  %v942 = vadd.f32 %v883, %v941
  %943 = vmatprep.mubr.bf16.mxu0 0
  %944 = vmatmul.mubr.bf16.gmra.mxu0 %v899
  %v945 = vpop.f32.mrf.mxu0
  %v946 = vadd.f32 %v888, %v945
  %v947 = vpop.f32.mrf.mxu0
  %v948 = vadd.f32 %v888, %v947
  %v949 = vpop.f32.mrf.mxu0
  %v950 = vadd.f32 %v893, %v949
  %v951 = vpop.f32.mrf.mxu0
  %v952 = vadd.f32 %v893, %v951
  %953 = vdwg.mxu0
  %954 = vmatprep.subr.bf16.mxu0 0
  %955 = vmatpush1.bf16.msra.mxu0 0
  %956 = vmatprep.subr.bf16.mxu0 0
  %957 = vmatpush1.bf16.msra.mxu0 0
  %958 = vmatprep.subr.bf16.mxu0 0
  %959 = vmatpush1.bf16.msra.mxu0 0
  %960 = vmatprep.subr.bf16.mxu0 0
  %961 = vmatpush1.bf16.msra.mxu0 0
  %962 = vmatprep.subr.bf16.mxu0 0
  %963 = vmatpush1.bf16.msra.mxu0 0
  %964 = vmatprep.subr.bf16.mxu0 0
  %965 = vmatpush1.bf16.msra.mxu0 0
  %966 = vmatprep.subr.bf16.mxu0 0
  %967 = vmatpush1.bf16.msra.mxu0 0
  %968 = vmatprep.subr.bf16.mxu0 %v870
  %969 = vmatpush1.bf16.msra.mxu0 %v869
  %970 = vmatprep.subr.bf16.mxu0 0
  %971 = vmatpush2.bf16.msra.mxu0 0
  %972 = vmatprep.subr.bf16.mxu0 0
  %973 = vmatpush2.bf16.msra.mxu0 0
  %974 = vmatprep.subr.bf16.mxu0 0
  %975 = vmatpush2.bf16.msra.mxu0 0
  %976 = vmatprep.subr.bf16.mxu0 0
  %977 = vmatpush2.bf16.msra.mxu0 0
  %978 = vmatprep.subr.bf16.mxu0 0
  %979 = vmatpush2.bf16.msra.mxu0 0
  %980 = vmatprep.subr.bf16.mxu0 0
  %981 = vmatpush2.bf16.msra.mxu0 0
  %982 = vmatprep.subr.bf16.mxu0 0
  %983 = vmatpush2.bf16.msra.mxu0 0
  %984 = vmatprep.subr.bf16.mxu0 0
  %985 = vmatpush2.bf16.msra.mxu0 0
  %986 = vmatprep.mubr.bf16.mxu0 0
  %987 = vmatmul.mubr.bf16.gmra.mxu0 %v896
  %v988 = vpop.f32.mrf.mxu0
  %v989 = vadd.f32 %v878, %v988
  %v990 = vpop.f32.mrf.mxu0
  %v991 = vadd.f32 %v878, %v990
  %v992 = vpop.f32.mrf.mxu0
  %v993 = vadd.f32 %v883, %v992
  %v994 = vpop.f32.mrf.mxu0
  %v995 = vadd.f32 %v883, %v994
  %996 = vmatprep.mubr.bf16.mxu0 0
  %997 = vmatmul.mubr.bf16.gmra.mxu0 %v899
  %v998 = vpop.f32.mrf.mxu0
  %v999 = vadd.f32 %v888, %v998
  %v1000 = vpop.f32.mrf.mxu0
  %v1001 = vadd.f32 %v888, %v1000
  %v1002 = vpop.f32.mrf.mxu0
  %v1003 = vadd.f32 %v893, %v1002
  %v1004 = vpop.f32.mrf.mxu0
  %v1005 = vadd.f32 %v893, %v1004
  %1006 = vdwg.mxu0
  %v1007 = vmax.f32 %v936, 0.0
  %v1008 = vmax.f32 %v938, 0.0
  %v1009 = vmax.f32 %v989, 0.0
  %v1010 = vmax.f32 %v991, 0.0
  %v1011 = vmax.f32 %v940, 0.0
  %v1012 = vmax.f32 %v942, 0.0
  %v1013 = vmax.f32 %v993, 0.0
  %v1014 = vmax.f32 %v995, 0.0
  %v1015 = vmax.f32 %v946, 0.0
  %v1016 = vmax.f32 %v948, 0.0
  %v1017 = vmax.f32 %v999, 0.0
  %v1018 = vmax.f32 %v1001, 0.0
  %v1019 = vmax.f32 %v950, 0.0
  %v1020 = vmax.f32 %v952, 0.0
  %v1021 = vmax.f32 %v1003, 0.0
  %v1022 = vmax.f32 %v1005, 0.0
  %v1023 = vld [vmem:[%s10] sm:$0xf]
  %v1024 = vpack.c.bf16 %v1023, %v1023
  %v1025 = vpack.c.bf16 %v1011, %v1007
  %v1026 = vpack.c.bf16 %v1012, %v1008
  %v1027 = vpack.c.bf16 %v1013, %v1009
  %v1028 = vpack.c.bf16 %v1014, %v1010
  %v1029 = vpack.c.bf16 %v1019, %v1015
  %v1030 = vpack.c.bf16 %v1020, %v1016
  %v1031 = vpack.c.bf16 %v1021, %v1017
  %v1032 = vpack.c.bf16 %v1022, %v1018
  %v1033 = vld [vmem:[%s11] sm:$0xf]
  %1035 = vset.pattern.permute.xlu0 0
  %1036 = vperm.xlu0 %1035, %v1033
  %v1037 = vpop.permute.xlu0 %1036
  %v1040 = vsel %vm251, %v1024, 0
  %1042 = vmatprep.subr.bf16.mxu0 0
  %1043 = vmatpush1.bf16.msra.mxu0 0
  %1044 = vmatprep.subr.bf16.mxu0 0
  %1045 = vmatpush1.bf16.msra.mxu0 0
  %1046 = vmatprep.subr.bf16.mxu0 0
  %1047 = vmatpush1.bf16.msra.mxu0 0
  %1048 = vmatprep.subr.bf16.mxu0 0
  %1049 = vmatpush1.bf16.msra.mxu0 0
  %1050 = vmatprep.subr.bf16.mxu0 0
  %1051 = vmatpush1.bf16.msra.mxu0 0
  %1052 = vmatprep.subr.bf16.mxu0 0
  %1053 = vmatpush1.bf16.msra.mxu0 0
  %1054 = vmatprep.subr.bf16.mxu0 %v1030
  %1055 = vmatpush1.bf16.msra.mxu0 %v1029
  %1056 = vmatprep.subr.bf16.mxu0 %v1026
  %1057 = vmatpush1.bf16.msra.mxu0 %v1025
  %1058 = vmatprep.subr.bf16.mxu0 0
  %1059 = vmatpush2.bf16.msra.mxu0 0
  %1060 = vmatprep.subr.bf16.mxu0 0
  %1061 = vmatpush2.bf16.msra.mxu0 0
  %1062 = vmatprep.subr.bf16.mxu0 0
  %1063 = vmatpush2.bf16.msra.mxu0 0
  %1064 = vmatprep.subr.bf16.mxu0 0
  %1065 = vmatpush2.bf16.msra.mxu0 0
  %1066 = vmatprep.subr.bf16.mxu0 0
  %1067 = vmatpush2.bf16.msra.mxu0 0
  %1068 = vmatprep.subr.bf16.mxu0 0
  %1069 = vmatpush2.bf16.msra.mxu0 0
  %1070 = vmatprep.subr.bf16.mxu0 0
  %1071 = vmatpush2.bf16.msra.mxu0 0
  %1072 = vmatprep.subr.bf16.mxu0 0
  %1073 = vmatpush2.bf16.msra.mxu0 0
  %1074 = vmatprep.mubr.bf16.mxu0 0
  %1075 = vmatmul.mubr.bf16.gmra.mxu0 %v1040
  %v1076 = vpop.f32.mrf.mxu0
  %v1077 = vadd.f32 %v1037, %v1076
  %v1078 = vpop.f32.mrf.mxu0
  %v1079 = vadd.f32 %v1037, %v1078
  %v1080 = vpop.f32.mrf.mxu0
  %v1081 = vpop.f32.mrf.mxu0
  %1082 = vdwg.mxu0
  %1083 = vmatprep.subr.bf16.mxu0 0
  %1084 = vmatpush1.bf16.msra.mxu0 0
  %1085 = vmatprep.subr.bf16.mxu0 0
  %1086 = vmatpush1.bf16.msra.mxu0 0
  %1087 = vmatprep.subr.bf16.mxu0 0
  %1088 = vmatpush1.bf16.msra.mxu0 0
  %1089 = vmatprep.subr.bf16.mxu0 0
  %1090 = vmatpush1.bf16.msra.mxu0 0
  %1091 = vmatprep.subr.bf16.mxu0 0
  %1092 = vmatpush1.bf16.msra.mxu0 0
  %1093 = vmatprep.subr.bf16.mxu0 0
  %1094 = vmatpush1.bf16.msra.mxu0 0
  %1095 = vmatprep.subr.bf16.mxu0 %v1032
  %1096 = vmatpush1.bf16.msra.mxu0 %v1031
  %1097 = vmatprep.subr.bf16.mxu0 %v1028
  %1098 = vmatpush1.bf16.msra.mxu0 %v1027
  %1099 = vmatprep.subr.bf16.mxu0 0
  %1100 = vmatpush2.bf16.msra.mxu0 0
  %1101 = vmatprep.subr.bf16.mxu0 0
  %1102 = vmatpush2.bf16.msra.mxu0 0
  %1103 = vmatprep.subr.bf16.mxu0 0
  %1104 = vmatpush2.bf16.msra.mxu0 0
  %1105 = vmatprep.subr.bf16.mxu0 0
  %1106 = vmatpush2.bf16.msra.mxu0 0
  %1107 = vmatprep.subr.bf16.mxu0 0
  %1108 = vmatpush2.bf16.msra.mxu0 0
  %1109 = vmatprep.subr.bf16.mxu0 0
  %1110 = vmatpush2.bf16.msra.mxu0 0
  %1111 = vmatprep.subr.bf16.mxu0 0
  %1112 = vmatpush2.bf16.msra.mxu0 0
  %1113 = vmatprep.subr.bf16.mxu0 0
  %1114 = vmatpush2.bf16.msra.mxu0 0
  %1115 = vmatprep.mubr.bf16.mxu0 0
  %1116 = vmatmul.mubr.bf16.gmra.mxu0 %v1040
  %v1117 = vpop.f32.mrf.mxu0
  %v1118 = vadd.f32 %v1037, %v1117
  %v1119 = vpop.f32.mrf.mxu0
  %v1120 = vadd.f32 %v1037, %v1119
  %v1121 = vpop.f32.mrf.mxu0
  %v1122 = vpop.f32.mrf.mxu0
  %1123 = vdwg.mxu0
  %v1128 = vcombine.low %v1077, %v1079
  %v1129 = vcombine.low %v1118, %v1120
  %1132 = vst [vmem:[%s12] sm:$0xff] %v1128
  %1133 = vst [vmem:[%s12 + $0x8] sm:$0xff] %v1129
  // Predicated region
  $region50: #{_lambda_.1} parent=0 // pred_check
    _
  $region51: #{_lambda_.1} parent=0 // pred_check_branch
    %1135 = sbr.rel (0) target = $region53
  $region52: #{_lambda_.1} parent=0 // pred_region
    _
  $region53: #{_lambda_.1} parent=0 // pred_fallthru
    _
  // Predicated region
  $region54: #{_lambda_.1} parent=0 // pred_check
    _
  $region55: #{_lambda_.1} parent=0 // pred_check_branch
    %1137 = sbr.rel (0) target = $region57
  $region56: #{_lambda_.1} parent=0 // pred_region
    _
  $region57: #{_lambda_.1} parent=0 // pred_fallthru
    _
  // Predicated region
  $region58: #{_lambda_.1} parent=0 // pred_check
    _
  $region59: #{_lambda_.1} parent=0 // pred_check_branch
    %1139 = sbr.rel (0) target = $region61
  $region60: #{_lambda_.1} parent=0 // pred_region
    _
  $region61: #{_lambda_.1} parent=0 // pred_fallthru
    _
  // Predicated region
  $region62: #{_lambda_.1} parent=0 // pred_check
    _
  $region63: #{_lambda_.1} parent=0 // pred_check_branch
    %1141 = sbr.rel (0) target = $region65
  $region64: #{_lambda_.1} parent=0 // pred_region
    _
  $region65: #{_lambda_.1} parent=0 // pred_fallthru
    _

</llo_original>
